<compile_context>
chip_gen: v5e
topology: v5e:2x2
jax: 0.10.0
libtpu: 0.0.40
codegen_flags: <defaults>
</compile_context>

<pallas_src>
import jax
import jax.numpy as jnp
from jax.experimental import pallas as pl
from jax.experimental.pallas import tpu as pltpu

_LANE = 128     # TPU lane width
_SUBLANE = 8    # f32 sublane packing


def _make_policy_kernel(num_actions):
    """Build the fused MLP kernel; num_actions is a static Python int."""

    def kernel(x_ref, w1_ref, b1_ref, w2_ref, b2_ref, o_ref):
        x = x_ref[...]                                              # (TILE_B, num_obs) f32
        # ---- Layer 1: Linear(num_obs, 16) + Sigmoid -------------------------
        z1 = jnp.dot(x, w1_ref[...],
                     preferred_element_type=jnp.float32) + b1_ref[...]
        # sigmoid = 1 / (1 + exp(-z)); exp + reciprocal both run on the EUP.
        h = pl.reciprocal(1.0 + jnp.exp(-z1), approx=True)          # (TILE_B, 16)
        # ---- Layer 2: Linear(16, num_actions) into a 128-lane slab ----------
        logits = jnp.dot(h, w2_ref[...],
                         preferred_element_type=jnp.float32) + b2_ref[...]  # (TILE_B, 128)
        # Mask the padded lanes so they do not leak into the softmax.
        # NOTE: plain Python float literal (not jnp scalar) to avoid capturing
        # a constant in the kernel closure.
        lane = jax.lax.broadcasted_iota(jnp.int32, logits.shape, 1)
        logits = jnp.where(lane < num_actions, logits, -1e30)
        # ---- Numerically-stable softmax over the last (lane) dim ------------
        m = jnp.max(logits, axis=-1, keepdims=True)
        e = jnp.exp(logits - m)
        denom = jnp.sum(e, axis=-1, keepdims=True)
        o_ref[...] = e * pl.reciprocal(denom, approx=True)          # (TILE_B, 128)

    return kernel


def policy_estimator_forward(observation, w1, b1, w2, b2, *, tile_b=1024):
    """y = softmax(sigmoid(x @ W1 + b1) @ W2 + b2), batched over rows of x.

    Weights are stored (in_features, out_features), i.e. already transposed
    relative to torch.nn.Linear, so the kernel computes x @ W + b.
    """
    B, num_obs = observation.shape
    hidden = w1.shape[1]
    num_actions = w2.shape[1]
    assert w1.shape == (num_obs, hidden)
    assert b1.shape == (1, hidden)
    assert w2.shape == (hidden, num_actions)
    assert b2.shape == (1, num_actions)
    assert num_actions <= _LANE

    # Lane-pad the output layer (tiny, one-time cost; in a real RL loop these
    # padded weights would be prepared once and reused across calls).
    w2p = jnp.zeros((hidden, _LANE), jnp.float32).at[:, :num_actions].set(
        w2.astype(jnp.float32))
    b2p = jnp.zeros((1, _LANE), jnp.float32).at[:, :num_actions].set(
        b2.astype(jnp.float32))

    # Batch tiling: round B up to a sublane multiple, cap the tile at tile_b,
    # then pad B to a whole number of tiles (padded rows are sliced off below).
    b_pad = -(-B // _SUBLANE) * _SUBLANE
    tb = min(tile_b, b_pad)
    b_pad = -(-b_pad // tb) * tb
    x = observation.astype(jnp.float32)
    if b_pad != B:
        x = jnp.pad(x, ((0, b_pad - B), (0, 0)))

    grid = (b_pad // tb,)
    out = pl.pallas_call(
        _make_policy_kernel(num_actions),
        out_shape=jax.ShapeDtypeStruct((b_pad, _LANE), jnp.float32),
        grid=grid,
        in_specs=[
            pl.BlockSpec((tb, num_obs), lambda i: (i, 0)),        # streamed per tile
            pl.BlockSpec((num_obs, hidden), lambda i: (0, 0)),    # VMEM-resident
            pl.BlockSpec((1, hidden), lambda i: (0, 0)),          # VMEM-resident
            pl.BlockSpec((hidden, _LANE), lambda i: (0, 0)),      # VMEM-resident
            pl.BlockSpec((1, _LANE), lambda i: (0, 0)),           # VMEM-resident
        ],
        out_specs=pl.BlockSpec((tb, _LANE), lambda i: (i, 0)),    # lane-dense stores
        compiler_params=pltpu.CompilerParams(
            dimension_semantics=("parallel",)),  # v7x: shard batch over both TCs
    )(x, w1.astype(jnp.float32), b1.astype(jnp.float32), w2p, b2p)

    return out[:B, :num_actions]


if __name__ == "__main__":
    # Synthetic env: target has 2 dims, curr_loc has 2 dims -> num_observations = 4.
    # action_space.n = 4 (up/down/left/right).
    num_observations = 4
    hidden = 16
    num_actions = 4

    key = jax.random.PRNGKey(0)
    k_obs, k_w1, k_b1, k_w2, k_b2 = jax.random.split(key, 5)

    # Deterministic parameter init (PyTorch-style uniform bounds, seeded).
    bound1 = 1.0 / (num_observations ** 0.5)
    w1 = jax.random.uniform(k_w1, (num_observations, hidden), jnp.float32, -bound1, bound1)
    b1 = jax.random.uniform(k_b1, (1, hidden), jnp.float32, -bound1, bound1)
    bound2 = 1.0 / (hidden ** 0.5)
    w2 = jax.random.uniform(k_w2, (hidden, num_actions), jnp.float32, -bound2, bound2)
    b2 = jax.random.uniform(k_b2, (1, num_actions), jnp.float32, -bound2, bound2)

    def reference(obs):
        h = jax.nn.sigmoid(obs @ w1 + b1)
        return jax.nn.softmax(h @ w2 + b2, axis=-1)

    # batch=8: single small tile.  batch=2500: exercises multi-step batch grid
    # (tile_b=1024 -> grid=3) plus ragged-batch padding/slicing.
    for batch in (8, 2500):
        obs = jax.random.normal(jax.random.fold_in(k_obs, batch),
                                (batch, num_observations), dtype=jnp.float32)
        out = policy_estimator_forward(obs, w1, b1, w2, b2)
        out = jax.block_until_ready(out)
        ref = reference(obs)
        assert out.shape == (batch, num_actions)
        assert jnp.allclose(out, ref, atol=5e-3, rtol=5e-3), f"mismatch vs reference (B={batch})"
        assert jnp.allclose(jnp.sum(out, axis=-1), 1.0, atol=5e-3), "softmax rows must sum to 1"

    print("KERNEL_OK")
</pallas_src>

<mosaic_0001>
module attributes {stable_mosaic.version = 11 : i64} {
  func.func @kernel(%arg0: i32, %arg1: memref<8x4xf32, #tpu.memory_space<vmem>>, %arg2: memref<4x16xf32, #tpu.memory_space<vmem>>, %arg3: memref<1x16xf32, #tpu.memory_space<vmem>>, %arg4: memref<16x128xf32, #tpu.memory_space<vmem>>, %arg5: memref<1x128xf32, #tpu.memory_space<vmem>>, %arg6: memref<8x128xf32, #tpu.memory_space<vmem>>) attributes {dimension_semantics = [#tpu.dimension_semantics<parallel>], iteration_bounds = array<i64: 1>, scalar_prefetch = 0 : i64, scratch_operands = 0 : i64, tpu.core_type = #tpu.core_type<tc>, window_params = [{transform_indices = @transform_0, window_bounds = array<i64: 8, 4>}, {pipeline_mode = #tpu.pipeline_mode<synchronous>, transform_indices = @transform_1, window_bounds = array<i64: 4, 16>}, {pipeline_mode = #tpu.pipeline_mode<synchronous>, transform_indices = @transform_2, window_bounds = array<i64: 1, 16>}, {pipeline_mode = #tpu.pipeline_mode<synchronous>, transform_indices = @transform_3, window_bounds = array<i64: 16, 128>}, {pipeline_mode = #tpu.pipeline_mode<synchronous>, transform_indices = @transform_4, window_bounds = array<i64: 1, 128>}, {transform_indices = @transform_5, window_bounds = array<i64: 8, 128>}]} {
    %c0 = arith.constant 0 : index
    %c0_0 = arith.constant 0 : index
    %0 = vector.load %arg1[%c0, %c0_0] : memref<8x4xf32, #tpu.memory_space<vmem>>, vector<8x4xf32>
    %c0_1 = arith.constant 0 : index
    %c0_2 = arith.constant 0 : index
    %1 = vector.load %arg2[%c0_1, %c0_2] : memref<4x16xf32, #tpu.memory_space<vmem>>, vector<4x16xf32>
    %cst = arith.constant dense<0.000000e+00> : vector<8x16xf32>
    %2 = tpu.matmul %0, %1, %cst {dimension_numbers = #tpu.dot_dimension_numbers<[1], [0], [0], [1], [0, 0, 1, 1], [], []>} : vector<8x4xf32>, vector<4x16xf32>, vector<8x16xf32> -> vector<8x16xf32>
    %c0_3 = arith.constant 0 : index
    %c0_4 = arith.constant 0 : index
    %3 = vector.load %arg3[%c0_3, %c0_4] : memref<1x16xf32, #tpu.memory_space<vmem>>, vector<1x16xf32>
    %4 = vector.broadcast %3 : vector<1x16xf32> to vector<8x16xf32>
    %5 = arith.addf %2, %4 : vector<8x16xf32>
    %cst_5 = arith.constant 0.000000e+00 : f32
    %6 = vector.broadcast %cst_5 : f32 to vector<8x16xf32>
    %7 = arith.subf %6, %5 : vector<8x16xf32>
    %8 = math.exp %7 : vector<8x16xf32>
    %cst_6 = arith.constant 1.000000e+00 : f32
    %9 = vector.broadcast %cst_6 : f32 to vector<8x16xf32>
    %10 = arith.addf %9, %8 : vector<8x16xf32>
    %11 = tpu.reciprocal %10 {approx = true} : vector<8x16xf32> -> vector<8x16xf32>
    %c0_7 = arith.constant 0 : index
    %c0_8 = arith.constant 0 : index
    %12 = vector.load %arg4[%c0_7, %c0_8] : memref<16x128xf32, #tpu.memory_space<vmem>>, vector<16x128xf32>
    %cst_9 = arith.constant dense<0.000000e+00> : vector<8x128xf32>
    %13 = tpu.matmul %11, %12, %cst_9 {dimension_numbers = #tpu.dot_dimension_numbers<[1], [0], [0], [1], [0, 0, 1, 1], [], []>} : vector<8x16xf32>, vector<16x128xf32>, vector<8x128xf32> -> vector<8x128xf32>
    %c0_10 = arith.constant 0 : index
    %c0_11 = arith.constant 0 : index
    %14 = vector.load %arg5[%c0_10, %c0_11] : memref<1x128xf32, #tpu.memory_space<vmem>>, vector<1x128xf32>
    %15 = vector.broadcast %14 : vector<1x128xf32> to vector<8x128xf32>
    %16 = arith.addf %13, %15 : vector<8x128xf32>
    %17 = tpu.iota {dimensions = array<i32: 1>} : vector<8x128xi32>
    %c4_i32 = arith.constant 4 : i32
    %18 = vector.broadcast %c4_i32 : i32 to vector<8x128xi32>
    %19 = arith.cmpi slt, %17, %18 : vector<8x128xi32>
    %cst_12 = arith.constant -1.000000e+30 : f32
    %20 = vector.broadcast %cst_12 : f32 to vector<8x128xf32>
    %21 = arith.select %19, %16, %20 : vector<8x128xi1>, vector<8x128xf32>
    %cst_13 = arith.constant dense<0xFF800000> : vector<8xf32>
    %22 = vector.multi_reduction <maximumf>, %21, %cst_13 [1] : vector<8x128xf32> to vector<8xf32>
    %23 = vector.shape_cast %22 : vector<8xf32> to vector<8x1xf32>
    %24 = vector.broadcast %23 : vector<8x1xf32> to vector<8x128xf32>
    %25 = arith.subf %21, %24 : vector<8x128xf32>
    %26 = math.exp %25 : vector<8x128xf32>
    %cst_14 = arith.constant dense<0.000000e+00> : vector<8xf32>
    %27 = vector.multi_reduction <add>, %26, %cst_14 [1] : vector<8x128xf32> to vector<8xf32>
    %28 = vector.shape_cast %27 : vector<8xf32> to vector<8x1xf32>
    %29 = tpu.reciprocal %28 {approx = true} : vector<8x1xf32> -> vector<8x1xf32>
    %30 = vector.broadcast %29 : vector<8x1xf32> to vector<8x128xf32>
    %31 = arith.mulf %26, %30 : vector<8x128xf32>
    %c0_15 = arith.constant 0 : index
    %c0_16 = arith.constant 0 : index
    %32 = vector.load %arg6[%c0_15, %c0_16] : memref<8x128xf32, #tpu.memory_space<vmem>>, vector<8x128xf32>
    tpu.vector_store %arg6[%c0_15, %c0_16], %31 {strides = array<i32>} : memref<8x128xf32, #tpu.memory_space<vmem>>, vector<8x128xf32>,
    return
  }
  func.func @transform_0(%arg0: i32) -> (i32, i32) {
    %c0_i32 = arith.constant 0 : i32
    %c0_i32_0 = arith.constant 0 : i32
    return %arg0, %c0_i32 : i32, i32
  }
  func.func @transform_1(%arg0: i32) -> (i32, i32) {
    %c0_i32 = arith.constant 0 : i32
    %c0_i32_0 = arith.constant 0 : i32
    %c0_i32_1 = arith.constant 0 : i32
    return %c0_i32, %c0_i32_0 : i32, i32
  }
  func.func @transform_2(%arg0: i32) -> (i32, i32) {
    %c0_i32 = arith.constant 0 : i32
    %c0_i32_0 = arith.constant 0 : i32
    %c0_i32_1 = arith.constant 0 : i32
    return %c0_i32, %c0_i32_0 : i32, i32
  }
  func.func @transform_3(%arg0: i32) -> (i32, i32) {
    %c0_i32 = arith.constant 0 : i32
    %c0_i32_0 = arith.constant 0 : i32
    %c0_i32_1 = arith.constant 0 : i32
    return %c0_i32, %c0_i32_0 : i32, i32
  }
  func.func @transform_4(%arg0: i32) -> (i32, i32) {
    %c0_i32 = arith.constant 0 : i32
    %c0_i32_0 = arith.constant 0 : i32
    %c0_i32_1 = arith.constant 0 : i32
    return %c0_i32, %c0_i32_0 : i32, i32
  }
  func.func @transform_5(%arg0: i32) -> (i32, i32) {
    %c0_i32 = arith.constant 0 : i32
    %c0_i32_0 = arith.constant 0 : i32
    return %arg0, %c0_i32 : i32, i32
  }
}

</mosaic_0001>

<llo_original>
// kernel: tpu_custom_call.1
$region0: #{tpu_custom_call.1}
  #allocation0 [shape = 'u32[]', space=smem, size = 0x4, offset = 0x4, fixed_abs, tag = 'smem constant byte address 0x4 - core index']
  #allocation1 [shape = 'u32[72,128]{1,0:T(1,128)}', space=vmem, size = 0x9000, scoped, tag = 'internal scratch']
  %s0 = inlined_call_operand.vmem [shape: f32[8,4], index: 0, kind: input, shape index: {}]
  %s1 = inlined_call_operand.vmem [shape: f32[4,16], index: 1, kind: input, shape index: {}]
  %s2 = inlined_call_operand.vmem [shape: f32[1,16], index: 2, kind: input, shape index: {}]
  %s3 = inlined_call_operand.hbm [shape: f32[16,128], index: 3, kind: input, shape index: {}]
  %s4 = inlined_call_operand.vmem [shape: f32[1,128], index: 4, kind: input, shape index: {}]
  %s5 = inlined_call_operand.hbm [shape: f32[8,128], index: 5, kind: output, shape index: {}]
  %s6 = sld [smem:[#allocation0]]
  $region34: #{tpu_custom_call.1} parent=0
    _
  %s8 = ssub.s32 1, %s6
  %s9 = scalar_select 0, %s8, %s6
  $region1: #{tpu_custom_call.1} parent=0
    #allocation2 [shape = 'u8[8192]{0}', space=vmem, size = 0x2000, scoped, tag = 'input window, operand 3, single buffered']
    #allocation3 [shape = 's32[1]{0}', space=sflag, size = 0x4, scoped, tag = 'scoped memory for tpu_custom_call.1']
    #allocation4 [shape = 's32[1]{0}', space=sflag, size = 0x4, scoped, tag = 'scoped memory for tpu_custom_call.1']
    #allocation5 [shape = 'u8[4096]{0}', space=vmem, size = 0x1000, scoped, tag = 'output window, operand 0, single buffered']
    %10 = vsyncpa [#allocation3], 0
    %11 = vsyncpa [#allocation4], 0
    // Predicated region
    $region2: #{tpu_custom_call.1} parent=1 // pred_check
      _
    $region3: #{tpu_custom_call.1} parent=1 // pred_check_branch
      %13 = sbr.rel (0) target = $region5
    $region4: #{tpu_custom_call.1} parent=1 // pred_region
      _
    $region5: #{tpu_custom_call.1} parent=1 // pred_fallthru
      _
    // Predicated region
    $region6: #{tpu_custom_call.1} parent=1 // pred_check
      _
    $region7: #{tpu_custom_call.1} parent=1 // pred_check_branch
      %15 = sbr.rel (0) target = $region9
    $region8: #{tpu_custom_call.1} parent=1 // pred_region
      _
    $region9: #{tpu_custom_call.1} parent=1 // pred_fallthru
      _
    // Predicated region
    $region10: #{tpu_custom_call.1} parent=1 // pred_check
      _
    $region11: #{tpu_custom_call.1} parent=1 // pred_check_branch
      %17 = sbr.rel (0) target = $region13
    $region12: #{tpu_custom_call.1} parent=1 // pred_region
      _
    $region13: #{tpu_custom_call.1} parent=1 // pred_fallthru
      _
    // Predicated region
    $region14: #{tpu_custom_call.1} parent=1 // pred_check
      _
    $region15: #{tpu_custom_call.1} parent=1 // pred_check_branch
      %19 = sbr.rel (0) target = $region17
    $region16: #{tpu_custom_call.1} parent=1 // pred_region
      %21 = vsyncadd [#allocation3], 0
      %s22 = sshll.u32 %s3, 4
      %s23 = int_to_ptr.hbm [resolvable:$true] %s22
      %s24 = sshll.u32 [#allocation2], 4
      %s25 = int_to_ptr.vmem [resolvable:$true] %s24
      %30 = dma.hbm_to_vmem [thread:$0]  %s23, 256, %s25, [#allocation3], 128, 128, 8
    $region17: #{tpu_custom_call.1} parent=1 // pred_fallthru
      _
    // Predicated region
    $region18: #{tpu_custom_call.1} parent=1 // pred_check
      _
    $region19: #{tpu_custom_call.1} parent=1 // pred_check_branch
      %32 = sbr.rel (0) target = $region21
    $region20: #{tpu_custom_call.1} parent=1 // pred_region
      _
    $region21: #{tpu_custom_call.1} parent=1 // pred_fallthru
      _
    // Predicated region
    $region22: #{tpu_custom_call.1} parent=1 // pred_check
      _
    $region23: #{tpu_custom_call.1} parent=1 // pred_check_branch
      %34 = sbr.rel (0) target = $region25
    $region24: #{tpu_custom_call.1} parent=1 // pred_region
      %36 = dma.done [#allocation3], 256
    $region25: #{tpu_custom_call.1} parent=1 // pred_fallthru
      _
    %v37 = vld [vmem:[%s0] sm:$0xff]
    %v38 = vld [vmem:[%s1] sm:$0xf]
    %v39 = vld [vmem:[%s2] sm:$0x1]
    %v41 = vperm.slane %v39, 0
    %vm43 = vcmask 31744
    %v45 = vsel %vm43, %v37, 0
    %vm47 = vcmask 1043456
    %v49 = vsel %vm47, %v38, 0
    %51 = vmatpush.msra.mxu0 0.0
    %52 = vmatpush.msra.mxu0 0.0
    %53 = vmatpush.msra.mxu0 0.0
    %54 = vmatpush.msra.mxu0 0.0
    %55 = vmatpush.msra.mxu0 0.0
    %56 = vmatpush.msra.mxu0 0.0
    %57 = vmatpush.msra.mxu0 0.0
    %58 = vmatpush.msra.mxu0 0.0
    %59 = vmatpush.msra.mxu0 0.0
    %60 = vmatpush.msra.mxu0 0.0
    %61 = vmatpush.msra.mxu0 0.0
    %62 = vmatpush.msra.mxu0 0.0
    %63 = vmatpush.msra.mxu0 0.0
    %64 = vmatpush.msra.mxu0 0.0
    %65 = vmatpush.msra.mxu0 0.0
    %66 = vmatpush.msra.mxu0 %v49
    %67 = vmatmul.f32.gmra.mxu0 %v45
    %v68 = vpop.f32.mrf.mxu0
    %v69 = vadd.f32 %v41, %v68
    %70 = vdwg.mxu0
    %v71 = vsub.f32 0.0, %v69
    %v72 = vmul.f32 %v71, 1.442695
    %v73 = vpow.pop %v72
    %v74 = vadd.f32 %v73, 1.0
    %v75 = vrcp.pop %v74
    %v76 = vld [vmem:[#allocation2] sm:$0xff]
    %v77 = vld [vmem:[#allocation2 + $0x8] sm:$0xff]
    %v78 = vld [vmem:[%s4] sm:$0x1]
    %v80 = vperm.slane %v78, 0
    %vm82 = vcmask 130048
    %v84 = vsel %vm82, %v75, 0
    %86 = vmatpush.msra.mxu0 0.0
    %87 = vmatpush.msra.mxu0 0.0
    %88 = vmatpush.msra.mxu0 0.0
    %89 = vmatpush.msra.mxu0 0.0
    %90 = vmatpush.msra.mxu0 0.0
    %91 = vmatpush.msra.mxu0 0.0
    %92 = vmatpush.msra.mxu0 0.0
    %93 = vmatpush.msra.mxu0 0.0
    %94 = vmatpush.msra.mxu0 0.0
    %95 = vmatpush.msra.mxu0 0.0
    %96 = vmatpush.msra.mxu0 0.0
    %97 = vmatpush.msra.mxu0 0.0
    %98 = vmatpush.msra.mxu0 0.0
    %99 = vmatpush.msra.mxu0 0.0
    %100 = vmatpush.msra.mxu0 %v77
    %101 = vmatpush.msra.mxu0 %v76
    %102 = vmatmul.f32.gmra.mxu0 %v84
    %v103 = vpop.f32.mrf.mxu0
    %v104 = vadd.f32 %v80, %v103
    %105 = vdwg.mxu0
    %v106 = vlaneseq
    %v107 = vand.u32 %v106, 127
    %vm108 = vcmp.lt.s32.totalorder %v107, 4
    %v109 = vsel %vm108, %v104, -1e+30
    %110 = vmax.xlane.f32.xlu0 %v109
    %v111 = vpop.xlane.xlu0 %110
    %v112 = vsub.f32 %v109, %v111
    %v113 = vmul.f32 %v112, 1.442695
    %v114 = vpow.pop %v113
    %115 = vadd.xlane.f32.xlu0 %v114
    %v116 = vpop.xlane.xlu0 %115
    %v117 = vrcp.pop %v116
    %v118 = vmul.f32 %v114, %v117
    %119 = vst [vmem:[#allocation5] sm:$0xff] %v118
    // Predicated region
    $region26: #{tpu_custom_call.1} parent=1 // pred_check
      _
    $region27: #{tpu_custom_call.1} parent=1 // pred_check_branch
      %121 = sbr.rel (0) target = $region29
    $region28: #{tpu_custom_call.1} parent=1 // pred_region
      %123 = vsyncadd [#allocation4], 0
      %s125 = sshll.u32 [#allocation5], 4
      %s126 = int_to_ptr.vmem [resolvable:$true] %s125
      %s127 = sshll.u32 %s5, 4
      %s128 = int_to_ptr.hbm [resolvable:$true] %s127
      %130 = dma.vmem_to_hbm [thread:$0]  %s126, 128, %s128, [#allocation4]
    $region29: #{tpu_custom_call.1} parent=1 // pred_fallthru
      _
    // Predicated region
    $region30: #{tpu_custom_call.1} parent=1 // pred_check
      _
    $region31: #{tpu_custom_call.1} parent=1 // pred_check_branch
      %132 = sbr.rel (0) target = $region33
    $region32: #{tpu_custom_call.1} parent=1 // pred_region
      %134 = dma.done [#allocation4], 128
    $region33: #{tpu_custom_call.1} parent=1 // pred_fallthru
      _
    %135 = vsyncpa [#allocation3], 1
    %136 = vsyncpa [#allocation4], 1

</llo_original>
